<compile_context>
chip_gen: v6e
topology: v6e:2x2x1
jax: 0.10.0
libtpu: 0.0.40
codegen_flags: <defaults>
</compile_context>

<pallas_src>
import functools

import jax
import jax.numpy as jnp
from jax import lax
from jax.experimental import pallas as pl
from jax.experimental.pallas import tpu as pltpu


# --------------------------------- kernel ------------------------------------

def vit_block_kernel(x_ref,
                     wqkv_ref, bqkv_ref,      # fused block-diag QKV (scale + LN1 folded)
                     w1_ref, b1_ref,          # MLP fc1 Dm-tile (LN2 affine folded)
                     w2_ref,                  # MLP fc2 Dm-tile
                     b2_ref,                  # MLP fc2 bias
                     o_ref,
                     y_scr, yn_scr, acc_scr,
                     *, n_heads, d_head, s_valid, matmul_dtype, approx_gelu):
    bb, S, D = x_ref.shape
    R = bb * S
    mm = matmul_dtype
    eps = 1e-5
    dm_i = pl.program_id(1)

    def _norm(z):
        # One-pass LayerNorm, no affine (gamma/beta folded into the next matmul).
        mu = jnp.mean(z, axis=-1, keepdims=True)
        var = jnp.maximum(jnp.mean(z * z, axis=-1, keepdims=True) - mu * mu, 0.0)
        return (z - mu) * lax.rsqrt(var + eps)

    # ------------- MSA phase: first Dm step of every batch block -------------
    @pl.when(dm_i == 0)
    def _msa_phase():
        x = x_ref[...]                                   # (bb, S, D) f32
        x2 = x.reshape(R, D)                             # S % 8 == 0 -> layout-preserving
        xn = _norm(x2)
        qkv = jnp.dot(xn.astype(mm), wqkv_ref[...],
                      preferred_element_type=jnp.float32) + bqkv_ref[...]   # (R, 3D)
        qkv3 = qkv.reshape(bb, S, 3 * D)

        if s_valid < S:   # static: sequence was padded host-side -> mask padded keys
            kmask = lax.broadcasted_iota(jnp.int32, (1, 1, S), 2) < s_valid

        heads = []
        for h in range(n_heads):                         # static unroll (small n_heads)
            q = qkv3[:, :, h * d_head:(h + 1) * d_head]                # pre-scaled
            k = qkv3[:, :, D + h * d_head:D + (h + 1) * d_head]
            v = qkv3[:, :, 2 * D + h * d_head:2 * D + (h + 1) * d_head]
            s = jnp.einsum('bqd,bkd->bqk', q.astype(mm), k.astype(mm),
                           preferred_element_type=jnp.float32)          # (bb, S, S)
            if s_valid < S:
                s = jnp.where(kmask, s, -1e30)
            s = s - jnp.max(s, axis=-1, keepdims=True)
            p = jnp.exp(s)
            attn = p * pl.reciprocal(jnp.sum(p, axis=-1, keepdims=True), approx=True)
            heads.append(jnp.einsum('bqk,bkd->bqd', attn.astype(mm), v.astype(mm),
                                    preferred_element_type=jnp.float32))
        msa = jnp.concatenate(heads, axis=-1)            # (bb, S, D)

        y = x2 + msa.reshape(R, D)                       # first residual
        y_scr[...] = y
        yn_scr[...] = _norm(y).astype(mm)                # norm2(y), pre-cast for the MXU
        acc_scr[...] = jnp.zeros_like(acc_scr)

    # ------------- MLP phase: one streamed Dm tile per grid step -------------
    h1 = jnp.dot(yn_scr[...], w1_ref[...],
                 preferred_element_type=jnp.float32) + b1_ref[...]      # (R, dm_block)
    if approx_gelu:   # tanh GELU (EUP slot)
        h1 = 0.5 * h1 * (1.0 + jnp.tanh(0.7978845608028654
                                        * (h1 + 0.044715 * h1 * h1 * h1)))
    else:             # exact (erf) GELU, matches torch.nn.GELU default
        h1 = 0.5 * h1 * (1.0 + lax.erf(h1 * 0.7071067811865476))
    acc_scr[...] += jnp.dot(h1.astype(mm), w2_ref[...],
                            preferred_element_type=jnp.float32)         # (R, D)

    @pl.when(dm_i == pl.num_programs(1) - 1)
    def _finalize():
        out = y_scr[...] + acc_scr[...] + b2_ref[...]                   # second residual
        o_ref[...] = out.reshape(bb, S, D).astype(o_ref.dtype)


# --------------------------------- wrapper -----------------------------------

def vit_block(x, params, n_heads, *, batch_block=None, dm_block=None,
              matmul_dtype=jnp.bfloat16, approx_gelu=False):
    B, S, D = x.shape
    H = n_heads
    dh = D // H
    (g1, b1, wq, bq, wk, bk, wv, bv, g2, b2, w1, bb1, w2, bb2) = params
    Dm = w1.shape[1]

    # ---- host-side weight preparation ----
    def blockdiag(w):  # (H, dh, dh) -> (D, D)
        rows = []
        for i in range(H):
            row = [w[i] if j == i else jnp.zeros((dh, dh), w.dtype) for j in range(H)]
            rows.append(jnp.concatenate(row, axis=1))
        return jnp.concatenate(rows, axis=0)

    scale = 1.0 / (dh ** 0.5)
    Wq = blockdiag(wq) * scale                           # fold 1/sqrt(dh) into the Q path
    Wk = blockdiag(wk)
    Wv = blockdiag(wv)
    W_qkv0 = jnp.concatenate([Wq, Wk, Wv], axis=1)                       # (D, 3D)
    b_qkv0 = jnp.concatenate([bq.reshape(1, D) * scale,
                              bk.reshape(1, D), bv.reshape(1, D)], axis=1)

    # Fold LayerNorm affine params into the adjacent matmuls:  (z*g + b) @ W + c
    #   = z @ (g[:,None] * W) + (b @ W + c)
    W_qkv = g1.reshape(D, 1) * W_qkv0
    b_qkv = b_qkv0 + b1.reshape(1, D) @ W_qkv0
    w1_f = g2.reshape(D, 1) * w1
    bb1_f = bb1 + b2.reshape(1, D) @ w1

    # bf16 matmul operands (f32 accumulation) by default -> halves weight VMEM / DMA.
    W_qkv_k = W_qkv.astype(matmul_dtype)
    w1_k = w1_f.astype(matmul_dtype)
    w2_k = w2.astype(matmul_dtype)
    b_qkv = b_qkv.astype(jnp.float32)
    bb1_f = bb1_f.astype(jnp.float32)
    bb2_f = bb2.astype(jnp.float32).reshape(1, D)

    # ---- pad sequence length to a sublane multiple; padded keys masked in-kernel ----
    S_pad = ((S + 7) // 8) * 8
    x_in = x if S_pad == S else jnp.pad(x, ((0, 0), (0, S_pad - S), (0, 0)))

    # ---- grid: several batch steps x Dm reduction steps ----
    if batch_block is None:
        bb = max(1, B // 8)          # aim for >= 8 pipelined batch steps
        while B % bb:
            bb -= 1
    else:
        bb = batch_block
    assert B % bb == 0

    if dm_block is None:
        dm_block = Dm
        if Dm > 512:
            for cand in (512, 384, 256, 128):
                if Dm % cand == 0:
                    dm_block = cand
                    break
    assert Dm % dm_block == 0 and (dm_block == Dm or dm_block % 128 == 0)

    grid = (B // bb, Dm // dm_block)

    kern = functools.partial(vit_block_kernel, n_heads=H, d_head=dh, s_valid=S,
                             matmul_dtype=matmul_dtype, approx_gelu=approx_gelu)

    def _const_spec(a):
        # Block index never changes -> fully resident, single-buffered.
        nd = a.ndim
        idx = lambda i, m, _nd=nd: (0,) * _nd
        try:
            return pl.BlockSpec(a.shape, idx, pipeline_mode=pl.Buffered(1))
        except Exception:   # jax without pipeline_mode support: default buffering
            return pl.BlockSpec(a.shape, idx)

    in_specs = [
        pl.BlockSpec((bb, S_pad, D), lambda i, m: (i, 0, 0)),           # x
        _const_spec(W_qkv_k),                                           # fused QKV weight
        _const_spec(b_qkv),                                             # fused QKV bias
        pl.BlockSpec((D, dm_block), lambda i, m: (0, m)),               # w1 tile (streamed)
        pl.BlockSpec((1, dm_block), lambda i, m: (0, m)),               # b1 tile (streamed)
        pl.BlockSpec((dm_block, D), lambda i, m: (m, 0)),               # w2 tile (streamed)
        _const_spec(bb2_f),                                             # fc2 bias
    ]
    out_spec = pl.BlockSpec((bb, S_pad, D), lambda i, m: (i, 0, 0))

    rows = bb * S_pad
    scratch = [
        pltpu.VMEM((rows, D), jnp.float32),      # y   (post-MSA residual)
        pltpu.VMEM((rows, D), matmul_dtype),     # norm2(y), pre-cast
        pltpu.VMEM((rows, D), jnp.float32),      # fc2 accumulator
    ]

    # Explicit VMEM budget: scoped defaults (16/32 MiB) are too small at real ViT sizes.
    try:
        cap = pltpu.get_tpu_info().vmem_capacity_bytes
        vmem_limit = int(min(100 * 2 ** 20, cap - 8 * 2 ** 20))
    except Exception:
        vmem_limit = 56 * 2 ** 20

    out = pl.pallas_call(
        kern,
        out_shape=jax.ShapeDtypeStruct((B, S_pad, D), x.dtype),
        grid=grid,
        in_specs=in_specs,
        out_specs=out_spec,
        scratch_shapes=scratch,
        compiler_params=pltpu.CompilerParams(
            dimension_semantics=("parallel", "arbitrary"),
            vmem_limit_bytes=vmem_limit),
    )(x_in, W_qkv_k, b_qkv, w1_k, bb1_f, w2_k, bb2_f)

    return out if S_pad == S else out[:, :S, :]


# ------------------------------ pure-JAX reference ---------------------------

def vit_block_ref(x, params, n_heads, approx_gelu=False):
    (g1, b1, wq, bq, wk, bk, wv, bv, g2, b2, w1, bb1, w2, bb2) = params
    D = x.shape[-1]
    d_head = D // n_heads
    hp = lax.Precision.HIGHEST

    def ln(z, g, b, eps=1e-5):
        mu = jnp.mean(z, axis=-1, keepdims=True)
        var = jnp.mean((z - mu) ** 2, axis=-1, keepdims=True)
        return (z - mu) / jnp.sqrt(var + eps) * g + b

    xn = ln(x, g1, b1)
    outs = []
    for h in range(n_heads):
        xh = xn[..., h * d_head:(h + 1) * d_head]
        q = jnp.einsum("bsd,de->bse", xh, wq[h], precision=hp) + bq[h]
        k = jnp.einsum("bsd,de->bse", xh, wk[h], precision=hp) + bk[h]
        v = jnp.einsum("bsd,de->bse", xh, wv[h], precision=hp) + bv[h]
        s = jnp.einsum("bqd,bkd->bqk", q, k, precision=hp) / (d_head ** 0.5)
        a = jax.nn.softmax(s, axis=-1)
        outs.append(jnp.einsum("bqk,bkd->bqd", a, v, precision=hp))
    y = x + jnp.concatenate(outs, axis=-1)
    yn = ln(y, g2, b2)
    h1 = jax.nn.gelu(jnp.einsum("bsd,de->bse", yn, w1, precision=hp) + bb1,
                     approximate=approx_gelu)
    return y + jnp.einsum("bse,ed->bsd", h1, w2, precision=hp) + bb2


# ----------------------------------- main ------------------------------------

if __name__ == "__main__":
    B, S, D = 4, 8, 64          # batch, tokens, hidden_d
    n_heads = 2
    mlp_ratio = 4
    d_head = D // n_heads
    Dm = mlp_ratio * D

    key = jax.random.PRNGKey(0)
    keys = jax.random.split(key, 16)
    f32 = jnp.float32

    x = jax.random.normal(keys[0], (B, S, D), f32)

    # Synthetic parameters (shapes from MyViTBlock / MyMSA).  LayerNorm affine params are
    # non-trivial so the host-side weight folding is actually exercised.
    g1 = 1.0 + 0.1 * jax.random.normal(keys[11], (1, D), f32)
    b1 = 0.1 * jax.random.normal(keys[12], (1, D), f32)
    wq = 0.1 * jax.random.normal(keys[1], (n_heads, d_head, d_head), f32)
    bq = 0.1 * jax.random.normal(keys[2], (n_heads, 1, d_head), f32)
    wk = 0.1 * jax.random.normal(keys[3], (n_heads, d_head, d_head), f32)
    bk = 0.1 * jax.random.normal(keys[4], (n_heads, 1, d_head), f32)
    wv = 0.1 * jax.random.normal(keys[5], (n_heads, d_head, d_head), f32)
    bv = 0.1 * jax.random.normal(keys[6], (n_heads, 1, d_head), f32)
    g2 = 1.0 + 0.1 * jax.random.normal(keys[13], (1, D), f32)
    b2 = 0.1 * jax.random.normal(keys[14], (1, D), f32)
    w1 = 0.1 * jax.random.normal(keys[7], (D, Dm), f32)
    bb1 = 0.1 * jax.random.normal(keys[8], (1, Dm), f32)
    w2 = 0.1 * jax.random.normal(keys[9], (Dm, D), f32)
    bb2 = 0.1 * jax.random.normal(keys[10], (1, D), f32)

    params = (g1, b1, wq, bq, wk, bk, wv, bv, g2, b2, w1, bb1, w2, bb2)

    ref = vit_block_ref(x, params, n_heads)

    # 1) Default path: bf16 matmul operands, multi-step batch grid.
    out = jax.block_until_ready(vit_block(x, params, n_heads))
    assert out.shape == (B, S, D) and out.dtype == f32
    err = float(jnp.max(jnp.abs(out - ref)))
    assert jnp.allclose(out, ref, atol=5e-2, rtol=5e-2), f"bf16 path max abs err = {err}"

    # 2) f32 matmuls, Dm-tiled MLP reduction (2 steps), 2 batch elements per step.
    out_f32 = jax.block_until_ready(
        vit_block(x, params, n_heads, batch_block=2, dm_block=128,
                  matmul_dtype=jnp.float32))
    err = float(jnp.max(jnp.abs(out_f32 - ref)))
    assert jnp.allclose(out_f32, ref, atol=5e-3, rtol=5e-3), f"f32 path max abs err = {err}"

    # 3) Non-multiple-of-8 sequence length (host-side padding + key masking).
    S_odd = 7
    x_odd = jax.random.normal(keys[15], (B, S_odd, D), f32)
    ref_odd = vit_block_ref(x_odd, params, n_heads)
    out_odd = jax.block_until_ready(
        vit_block(x_odd, params, n_heads, matmul_dtype=jnp.float32))
    assert out_odd.shape == (B, S_odd, D)
    err = float(jnp.max(jnp.abs(out_odd - ref_odd)))
    assert jnp.allclose(out_odd, ref_odd, atol=5e-3, rtol=5e-3), \
        f"padded-S path max abs err = {err}"

    # 4) tanh-approx GELU option (EUP path) against a matching reference.
    ref_tanh = vit_block_ref(x, params, n_heads, approx_gelu=True)
    out_tanh = jax.block_until_ready(
        vit_block(x, params, n_heads, matmul_dtype=jnp.float32, approx_gelu=True))
    err = float(jnp.max(jnp.abs(out_tanh - ref_tanh)))
    assert jnp.allclose(out_tanh, ref_tanh, atol=5e-3, rtol=5e-3), \
        f"approx-gelu path max abs err = {err}"

    print("KERNEL_OK")
</pallas_src>

<mosaic_0001>
module attributes {stable_mosaic.version = 11 : i64} {
  func.func @vit_block_kernel(%arg0: i32, %arg1: i32, %arg2: memref<1x8x64xf32, #tpu.memory_space<vmem>>, %arg3: memref<64x192xbf16, #tpu.memory_space<vmem>>, %arg4: memref<1x192xf32, #tpu.memory_space<vmem>>, %arg5: memref<64x256xbf16, #tpu.memory_space<vmem>>, %arg6: memref<1x256xf32, #tpu.memory_space<vmem>>, %arg7: memref<256x64xbf16, #tpu.memory_space<vmem>>, %arg8: memref<1x64xf32, #tpu.memory_space<vmem>>, %arg9: memref<1x8x64xf32, #tpu.memory_space<vmem>>, %arg10: memref<8x64xf32, #tpu.memory_space<vmem>>, %arg11: memref<8x64xbf16, #tpu.memory_space<vmem>>, %arg12: memref<8x64xf32, #tpu.memory_space<vmem>>) attributes {dimension_semantics = [#tpu.dimension_semantics<parallel>, #tpu.dimension_semantics<arbitrary>], iteration_bounds = array<i64: 4, 1>, scalar_prefetch = 0 : i64, scratch_operands = 3 : i64, tpu.core_type = #tpu.core_type<tc>, window_params = [{transform_indices = @transform_0, window_bounds = array<i64: 1, 8, 64>}, {pipeline_mode = #tpu.pipeline_mode<synchronous>, transform_indices = @transform_1, window_bounds = array<i64: 64, 192>}, {pipeline_mode = #tpu.pipeline_mode<synchronous>, transform_indices = @transform_2, window_bounds = array<i64: 1, 192>}, {transform_indices = @transform_3, window_bounds = array<i64: 64, 256>}, {transform_indices = @transform_4, window_bounds = array<i64: 1, 256>}, {transform_indices = @transform_5, window_bounds = array<i64: 256, 64>}, {pipeline_mode = #tpu.pipeline_mode<synchronous>, transform_indices = @transform_6, window_bounds = array<i64: 1, 64>}, {transform_indices = @transform_7, window_bounds = array<i64: 1, 8, 64>}]} {
    %c0_i32 = arith.constant 0 : i32
    %0 = arith.cmpi eq, %arg1, %c0_i32 : i32
    %1 = arith.extui %0 : i1 to i32
    %c0_i32_0 = arith.constant 0 : i32
    %2 = arith.cmpi ne, %1, %c0_i32_0 : i32
    scf.if %2 {
      %c0_18 = arith.constant 0 : index
      %c0_19 = arith.constant 0 : index
      %c0_20 = arith.constant 0 : index
      %26 = vector.load %arg2[%c0_18, %c0_19, %c0_20] : memref<1x8x64xf32, #tpu.memory_space<vmem>>, vector<1x8x64xf32>
      %27 = vector.shape_cast %26 : vector<1x8x64xf32> to vector<8x64xf32>
      %cst_21 = arith.constant dense<0.000000e+00> : vector<8xf32>
      %28 = vector.multi_reduction <add>, %27, %cst_21 [1] : vector<8x64xf32> to vector<8xf32>
      %29 = vector.shape_cast %28 : vector<8xf32> to vector<8x1xf32>
      %cst_22 = arith.constant 6.400000e+01 : f32
      %30 = vector.broadcast %cst_22 : f32 to vector<8x1xf32>
      %31 = arith.divf %29, %30 : vector<8x1xf32>
      %32 = arith.mulf %27, %27 : vector<8x64xf32>
      %cst_23 = arith.constant dense<0.000000e+00> : vector<8xf32>
      %33 = vector.multi_reduction <add>, %32, %cst_23 [1] : vector<8x64xf32> to vector<8xf32>
      %34 = vector.shape_cast %33 : vector<8xf32> to vector<8x1xf32>
      %cst_24 = arith.constant 6.400000e+01 : f32
      %35 = vector.broadcast %cst_24 : f32 to vector<8x1xf32>
      %36 = arith.divf %34, %35 : vector<8x1xf32>
      %37 = arith.mulf %31, %31 : vector<8x1xf32>
      %38 = arith.subf %36, %37 : vector<8x1xf32>
      %cst_25 = arith.constant 0.000000e+00 : f32
      %39 = vector.broadcast %cst_25 : f32 to vector<8x1xf32>
      %40 = arith.maximumf %38, %39 : vector<8x1xf32>
      %41 = vector.broadcast %31 : vector<8x1xf32> to vector<8x64xf32>
      %42 = arith.subf %27, %41 : vector<8x64xf32>
      %cst_26 = arith.constant 9.99999974E-6 : f32
      %43 = vector.broadcast %cst_26 : f32 to vector<8x1xf32>
      %44 = arith.addf %40, %43 : vector<8x1xf32>
      %45 = math.rsqrt %44 : vector<8x1xf32>
      %46 = vector.broadcast %45 : vector<8x1xf32> to vector<8x64xf32>
      %47 = arith.mulf %42, %46 : vector<8x64xf32>
      %48 = arith.truncf %47 : vector<8x64xf32> to vector<8x64xbf16>
      %c0_27 = arith.constant 0 : index
      %c0_28 = arith.constant 0 : index
      %49 = vector.load %arg3[%c0_27, %c0_28] : memref<64x192xbf16, #tpu.memory_space<vmem>>, vector<64x192xbf16>
      %cst_29 = arith.constant dense<0.000000e+00> : vector<8x192xf32>
      %50 = tpu.matmul %48, %49, %cst_29 {dimension_numbers = #tpu.dot_dimension_numbers<[1], [0], [0], [1], [0, 0, 1, 1], [], []>} : vector<8x64xbf16>, vector<64x192xbf16>, vector<8x192xf32> -> vector<8x192xf32>
      %c0_30 = arith.constant 0 : index
      %c0_31 = arith.constant 0 : index
      %51 = vector.load %arg4[%c0_30, %c0_31] : memref<1x192xf32, #tpu.memory_space<vmem>>, vector<1x192xf32>
      %52 = vector.broadcast %51 : vector<1x192xf32> to vector<8x192xf32>
      %53 = arith.addf %50, %52 : vector<8x192xf32>
      %54 = vector.shape_cast %53 : vector<8x192xf32> to vector<1x8x192xf32>
      %55 = vector.extract_strided_slice %54 {offsets = [0, 0, 0], sizes = [1, 8, 32], strides = [1, 1, 1]} : vector<1x8x192xf32> to vector<1x8x32xf32>
      %56 = vector.extract_strided_slice %54 {offsets = [0, 0, 64], sizes = [1, 8, 32], strides = [1, 1, 1]} : vector<1x8x192xf32> to vector<1x8x32xf32>
      %57 = vector.extract_strided_slice %54 {offsets = [0, 0, 128], sizes = [1, 8, 32], strides = [1, 1, 1]} : vector<1x8x192xf32> to vector<1x8x32xf32>
      %58 = arith.truncf %55 : vector<1x8x32xf32> to vector<1x8x32xbf16>
      %59 = arith.truncf %56 : vector<1x8x32xf32> to vector<1x8x32xbf16>
      "tpu.trace_start"() <{level = 10 : i32, message = "bqd,bkd->bqk"}> : () -> ()
      %cst_32 = arith.constant dense<0.000000e+00> : vector<1x8x8xf32>
      %60 = tpu.matmul %58, %59, %cst_32 {dimension_numbers = #tpu.dot_dimension_numbers<[2], [2], [1], [1], [0, 0, 0, 1, 1, 1], [0], [0]>} : vector<1x8x32xbf16>, vector<1x8x32xbf16>, vector<1x8x8xf32> -> vector<1x8x8xf32>
      "tpu.trace_stop"() : () -> ()
      %cst_33 = arith.constant dense<0xFF800000> : vector<1x8xf32>
      %61 = vector.multi_reduction <maximumf>, %60, %cst_33 [2] : vector<1x8x8xf32> to vector<1x8xf32>
      %62 = vector.shape_cast %61 : vector<1x8xf32> to vector<1x8x1xf32>
      %63 = vector.broadcast %62 : vector<1x8x1xf32> to vector<1x8x8xf32>
      %64 = arith.subf %60, %63 : vector<1x8x8xf32>
      %65 = math.exp %64 : vector<1x8x8xf32>
      %cst_34 = arith.constant dense<0.000000e+00> : vector<1x8xf32>
      %66 = vector.multi_reduction <add>, %65, %cst_34 [2] : vector<1x8x8xf32> to vector<1x8xf32>
      %67 = vector.shape_cast %66 : vector<1x8xf32> to vector<1x8x1xf32>
      %68 = tpu.reciprocal %67 {approx = true} : vector<1x8x1xf32> -> vector<1x8x1xf32>
      %69 = vector.broadcast %68 : vector<1x8x1xf32> to vector<1x8x8xf32>
      %70 = arith.mulf %65, %69 : vector<1x8x8xf32>
      %71 = arith.truncf %70 : vector<1x8x8xf32> to vector<1x8x8xbf16>
      %72 = arith.truncf %57 : vector<1x8x32xf32> to vector<1x8x32xbf16>
      "tpu.trace_start"() <{level = 10 : i32, message = "bqk,bkd->bqd"}> : () -> ()
      %cst_35 = arith.constant dense<0.000000e+00> : vector<1x8x32xf32>
      %73 = tpu.matmul %71, %72, %cst_35 {dimension_numbers = #tpu.dot_dimension_numbers<[2], [1], [1], [2], [0, 0, 0, 1, 1, 2], [0], [0]>} : vector<1x8x8xbf16>, vector<1x8x32xbf16>, vector<1x8x32xf32> -> vector<1x8x32xf32>
      "tpu.trace_stop"() : () -> ()
      %74 = vector.extract_strided_slice %54 {offsets = [0, 0, 32], sizes = [1, 8, 32], strides = [1, 1, 1]} : vector<1x8x192xf32> to vector<1x8x32xf32>
      %75 = vector.extract_strided_slice %54 {offsets = [0, 0, 96], sizes = [1, 8, 32], strides = [1, 1, 1]} : vector<1x8x192xf32> to vector<1x8x32xf32>
      %76 = vector.extract_strided_slice %54 {offsets = [0, 0, 160], sizes = [1, 8, 32], strides = [1, 1, 1]} : vector<1x8x192xf32> to vector<1x8x32xf32>
      %77 = arith.truncf %74 : vector<1x8x32xf32> to vector<1x8x32xbf16>
      %78 = arith.truncf %75 : vector<1x8x32xf32> to vector<1x8x32xbf16>
      "tpu.trace_start"() <{level = 10 : i32, message = "bqd,bkd->bqk"}> : () -> ()
      %cst_36 = arith.constant dense<0.000000e+00> : vector<1x8x8xf32>
      %79 = tpu.matmul %77, %78, %cst_36 {dimension_numbers = #tpu.dot_dimension_numbers<[2], [2], [1], [1], [0, 0, 0, 1, 1, 1], [0], [0]>} : vector<1x8x32xbf16>, vector<1x8x32xbf16>, vector<1x8x8xf32> -> vector<1x8x8xf32>
      "tpu.trace_stop"() : () -> ()
      %cst_37 = arith.constant dense<0xFF800000> : vector<1x8xf32>
      %80 = vector.multi_reduction <maximumf>, %79, %cst_37 [2] : vector<1x8x8xf32> to vector<1x8xf32>
      %81 = vector.shape_cast %80 : vector<1x8xf32> to vector<1x8x1xf32>
      %82 = vector.broadcast %81 : vector<1x8x1xf32> to vector<1x8x8xf32>
      %83 = arith.subf %79, %82 : vector<1x8x8xf32>
      %84 = math.exp %83 : vector<1x8x8xf32>
      %cst_38 = arith.constant dense<0.000000e+00> : vector<1x8xf32>
      %85 = vector.multi_reduction <add>, %84, %cst_38 [2] : vector<1x8x8xf32> to vector<1x8xf32>
      %86 = vector.shape_cast %85 : vector<1x8xf32> to vector<1x8x1xf32>
      %87 = tpu.reciprocal %86 {approx = true} : vector<1x8x1xf32> -> vector<1x8x1xf32>
      %88 = vector.broadcast %87 : vector<1x8x1xf32> to vector<1x8x8xf32>
      %89 = arith.mulf %84, %88 : vector<1x8x8xf32>
      %90 = arith.truncf %89 : vector<1x8x8xf32> to vector<1x8x8xbf16>
      %91 = arith.truncf %76 : vector<1x8x32xf32> to vector<1x8x32xbf16>
      "tpu.trace_start"() <{level = 10 : i32, message = "bqk,bkd->bqd"}> : () -> ()
      %cst_39 = arith.constant dense<0.000000e+00> : vector<1x8x32xf32>
      %92 = tpu.matmul %90, %91, %cst_39 {dimension_numbers = #tpu.dot_dimension_numbers<[2], [1], [1], [2], [0, 0, 0, 1, 1, 2], [0], [0]>} : vector<1x8x8xbf16>, vector<1x8x32xbf16>, vector<1x8x32xf32> -> vector<1x8x32xf32>
      "tpu.trace_stop"() : () -> ()
      %93 = tpu.concatenate %73, %92 in 2 : vector<1x8x32xf32>, vector<1x8x32xf32> -> vector<1x8x64xf32>
      %94 = vector.shape_cast %93 : vector<1x8x64xf32> to vector<8x64xf32>
      %95 = arith.addf %27, %94 : vector<8x64xf32>
      %c0_40 = arith.constant 0 : index
      %c0_41 = arith.constant 0 : index
      %96 = vector.load %arg10[%c0_40, %c0_41] : memref<8x64xf32, #tpu.memory_space<vmem>>, vector<8x64xf32>
      tpu.vector_store %arg10[%c0_40, %c0_41], %95 {strides = array<i32>} : memref<8x64xf32, #tpu.memory_space<vmem>>, vector<8x64xf32>,
      %cst_42 = arith.constant dense<0.000000e+00> : vector<8xf32>
      %97 = vector.multi_reduction <add>, %95, %cst_42 [1] : vector<8x64xf32> to vector<8xf32>
      %98 = vector.shape_cast %97 : vector<8xf32> to vector<8x1xf32>
      %cst_43 = arith.constant 6.400000e+01 : f32
      %99 = vector.broadcast %cst_43 : f32 to vector<8x1xf32>
      %100 = arith.divf %98, %99 : vector<8x1xf32>
      %101 = arith.mulf %95, %95 : vector<8x64xf32>
      %cst_44 = arith.constant dense<0.000000e+00> : vector<8xf32>
      %102 = vector.multi_reduction <add>, %101, %cst_44 [1] : vector<8x64xf32> to vector<8xf32>
      %103 = vector.shape_cast %102 : vector<8xf32> to vector<8x1xf32>
      %cst_45 = arith.constant 6.400000e+01 : f32
      %104 = vector.broadcast %cst_45 : f32 to vector<8x1xf32>
      %105 = arith.divf %103, %104 : vector<8x1xf32>
      %106 = arith.mulf %100, %100 : vector<8x1xf32>
      %107 = arith.subf %105, %106 : vector<8x1xf32>
      %cst_46 = arith.constant 0.000000e+00 : f32
      %108 = vector.broadcast %cst_46 : f32 to vector<8x1xf32>
      %109 = arith.maximumf %107, %108 : vector<8x1xf32>
      %110 = vector.broadcast %100 : vector<8x1xf32> to vector<8x64xf32>
      %111 = arith.subf %95, %110 : vector<8x64xf32>
      %cst_47 = arith.constant 9.99999974E-6 : f32
      %112 = vector.broadcast %cst_47 : f32 to vector<8x1xf32>
      %113 = arith.addf %109, %112 : vector<8x1xf32>
      %114 = math.rsqrt %113 : vector<8x1xf32>
      %115 = vector.broadcast %114 : vector<8x1xf32> to vector<8x64xf32>
      %116 = arith.mulf %111, %115 : vector<8x64xf32>
      %117 = arith.truncf %116 : vector<8x64xf32> to vector<8x64xbf16>
      %c0_48 = arith.constant 0 : index
      %c0_49 = arith.constant 0 : index
      %118 = vector.load %arg11[%c0_48, %c0_49] : memref<8x64xbf16, #tpu.memory_space<vmem>>, vector<8x64xbf16>
      tpu.vector_store %arg11[%c0_48, %c0_49], %117 {strides = array<i32>} : memref<8x64xbf16, #tpu.memory_space<vmem>>, vector<8x64xbf16>,
      %cst_50 = arith.constant 0.000000e+00 : f32
      %119 = vector.broadcast %cst_50 : f32 to vector<8x64xf32>
      %c0_51 = arith.constant 0 : index
      %c0_52 = arith.constant 0 : index
      %120 = vector.load %arg12[%c0_51, %c0_52] : memref<8x64xf32, #tpu.memory_space<vmem>>, vector<8x64xf32>
      tpu.vector_store %arg12[%c0_51, %c0_52], %119 {strides = array<i32>} : memref<8x64xf32, #tpu.memory_space<vmem>>, vector<8x64xf32>,
    } else {
    }
    %c0 = arith.constant 0 : index
    %c0_1 = arith.constant 0 : index
    %3 = vector.load %arg11[%c0, %c0_1] : memref<8x64xbf16, #tpu.memory_space<vmem>>, vector<8x64xbf16>
    %c0_2 = arith.constant 0 : index
    %c0_3 = arith.constant 0 : index
    %4 = vector.load %arg5[%c0_2, %c0_3] : memref<64x256xbf16, #tpu.memory_space<vmem>>, vector<64x256xbf16>
    %cst = arith.constant dense<0.000000e+00> : vector<8x256xf32>
    %5 = tpu.matmul %3, %4, %cst {dimension_numbers = #tpu.dot_dimension_numbers<[1], [0], [0], [1], [0, 0, 1, 1], [], []>} : vector<8x64xbf16>, vector<64x256xbf16>, vector<8x256xf32> -> vector<8x256xf32>
    %c0_4 = arith.constant 0 : index
    %c0_5 = arith.constant 0 : index
    %6 = vector.load %arg6[%c0_4, %c0_5] : memref<1x256xf32, #tpu.memory_space<vmem>>, vector<1x256xf32>
    %7 = vector.broadcast %6 : vector<1x256xf32> to vector<8x256xf32>
    %8 = arith.addf %5, %7 : vector<8x256xf32>
    %cst_6 = arith.constant 5.000000e-01 : f32
    %9 = vector.broadcast %cst_6 : f32 to vector<8x256xf32>
    %10 = arith.mulf %9, %8 : vector<8x256xf32>
    %cst_7 = arith.constant 0.707106769 : f32
    %11 = vector.broadcast %cst_7 : f32 to vector<8x256xf32>
    %12 = arith.mulf %8, %11 : vector<8x256xf32>
    %13 = math.erf %12 : vector<8x256xf32>
    %cst_8 = arith.constant 1.000000e+00 : f32
    %14 = vector.broadcast %cst_8 : f32 to vector<8x256xf32>
    %15 = arith.addf %14, %13 : vector<8x256xf32>
    %16 = arith.mulf %10, %15 : vector<8x256xf32>
    %c0_9 = arith.constant 0 : index
    %c0_10 = arith.constant 0 : index
    %17 = vector.load %arg12[%c0_9, %c0_10] : memref<8x64xf32, #tpu.memory_space<vmem>>, vector<8x64xf32>
    %18 = arith.truncf %16 : vector<8x256xf32> to vector<8x256xbf16>
    %c0_11 = arith.constant 0 : index
    %c0_12 = arith.constant 0 : index
    %19 = vector.load %arg7[%c0_11, %c0_12] : memref<256x64xbf16, #tpu.memory_space<vmem>>, vector<256x64xbf16>
    %cst_13 = arith.constant dense<0.000000e+00> : vector<8x64xf32>
    %20 = tpu.matmul %18, %19, %cst_13 {dimension_numbers = #tpu.dot_dimension_numbers<[1], [0], [0], [1], [0, 0, 1, 1], [], []>} : vector<8x256xbf16>, vector<256x64xbf16>, vector<8x64xf32> -> vector<8x64xf32>
    %21 = arith.addf %17, %20 : vector<8x64xf32>
    %c0_14 = arith.constant 0 : index
    %c0_15 = arith.constant 0 : index
    %22 = vector.load %arg12[%c0_14, %c0_15] : memref<8x64xf32, #tpu.memory_space<vmem>>, vector<8x64xf32>
    tpu.vector_store %arg12[%c0_14, %c0_15], %21 {strides = array<i32>} : memref<8x64xf32, #tpu.memory_space<vmem>>, vector<8x64xf32>,
    %c0_i32_16 = arith.constant 0 : i32
    %23 = arith.cmpi eq, %arg1, %c0_i32_16 : i32
    %24 = arith.extui %23 : i1 to i32
    %c0_i32_17 = arith.constant 0 : i32
    %25 = arith.cmpi ne, %24, %c0_i32_17 : i32
    scf.if %25 {
      %c0_18 = arith.constant 0 : index
      %c0_19 = arith.constant 0 : index
      %26 = vector.load %arg10[%c0_18, %c0_19] : memref<8x64xf32, #tpu.memory_space<vmem>>, vector<8x64xf32>
      %c0_20 = arith.constant 0 : index
      %c0_21 = arith.constant 0 : index
      %27 = vector.load %arg12[%c0_20, %c0_21] : memref<8x64xf32, #tpu.memory_space<vmem>>, vector<8x64xf32>
      %28 = arith.addf %26, %27 : vector<8x64xf32>
      %c0_22 = arith.constant 0 : index
      %c0_23 = arith.constant 0 : index
      %29 = vector.load %arg8[%c0_22, %c0_23] : memref<1x64xf32, #tpu.memory_space<vmem>>, vector<1x64xf32>
      %30 = vector.broadcast %29 : vector<1x64xf32> to vector<8x64xf32>
      %31 = arith.addf %28, %30 : vector<8x64xf32>
      %32 = vector.shape_cast %31 : vector<8x64xf32> to vector<1x8x64xf32>
      %c0_24 = arith.constant 0 : index
      %c0_25 = arith.constant 0 : index
      %c0_26 = arith.constant 0 : index
      %33 = vector.load %arg9[%c0_24, %c0_25, %c0_26] : memref<1x8x64xf32, #tpu.memory_space<vmem>>, vector<1x8x64xf32>
      tpu.vector_store %arg9[%c0_24, %c0_25, %c0_26], %32 {strides = array<i32>} : memref<1x8x64xf32, #tpu.memory_space<vmem>>, vector<1x8x64xf32>,
    } else {
    }
    return
  }
  func.func @transform_0(%arg0: i32, %arg1: i32) -> (i32, i32, i32) {
    %c0_i32 = arith.constant 0 : i32
    %c0_i32_0 = arith.constant 0 : i32
    %c0_i32_1 = arith.constant 0 : i32
    return %arg0, %c0_i32, %c0_i32_0 : i32, i32, i32
  }
  func.func @transform_1(%arg0: i32, %arg1: i32) -> (i32, i32) {
    %c0_i32 = arith.constant 0 : i32
    %c0_i32_0 = arith.constant 0 : i32
    %c0_i32_1 = arith.constant 0 : i32
    return %c0_i32, %c0_i32_0 : i32, i32
  }
  func.func @transform_2(%arg0: i32, %arg1: i32) -> (i32, i32) {
    %c0_i32 = arith.constant 0 : i32
    %c0_i32_0 = arith.constant 0 : i32
    %c0_i32_1 = arith.constant 0 : i32
    return %c0_i32, %c0_i32_0 : i32, i32
  }
  func.func @transform_3(%arg0: i32, %arg1: i32) -> (i32, i32) {
    %c0_i32 = arith.constant 0 : i32
    %c0_i32_0 = arith.constant 0 : i32
    return %c0_i32, %arg1 : i32, i32
  }
  func.func @transform_4(%arg0: i32, %arg1: i32) -> (i32, i32) {
    %c0_i32 = arith.constant 0 : i32
    %c0_i32_0 = arith.constant 0 : i32
    return %c0_i32, %arg1 : i32, i32
  }
  func.func @transform_5(%arg0: i32, %arg1: i32) -> (i32, i32) {
    %c0_i32 = arith.constant 0 : i32
    %c0_i32_0 = arith.constant 0 : i32
    return %arg1, %c0_i32 : i32, i32
  }
  func.func @transform_6(%arg0: i32, %arg1: i32) -> (i32, i32) {
    %c0_i32 = arith.constant 0 : i32
    %c0_i32_0 = arith.constant 0 : i32
    %c0_i32_1 = arith.constant 0 : i32
    return %c0_i32, %c0_i32_0 : i32, i32
  }
  func.func @transform_7(%arg0: i32, %arg1: i32) -> (i32, i32, i32) {
    %c0_i32 = arith.constant 0 : i32
    %c0_i32_0 = arith.constant 0 : i32
    %c0_i32_1 = arith.constant 0 : i32
    return %arg0, %c0_i32, %c0_i32_0 : i32, i32, i32
  }
}

</mosaic_0001>

<llo_original>
// kernel: tpu_custom_call.1
$region0: #{tpu_custom_call.1}
  #allocation0 [shape = 'u32[]', space=smem, size = 0x4, offset = 0x4, fixed_abs, tag = 'smem constant byte address 0x4 - core index']
  #allocation1 [shape = 'u32[144,128]{1,0:T(1,128)}', space=vmem, size = 0x12000, scoped, tag = 'internal scratch']
  #allocation2 [shape = 'f32[8,64]{1,0:T(8,128)}', space=vmem, size = 0x1000, scoped, tag = 'scratch operand']
  #allocation3 [shape = 'bf16[8,64]{1,0:T(8,128)(2,1)}', space=vmem, size = 0x800, scoped, tag = 'scratch operand']
  #allocation4 [shape = 'f32[8,64]{1,0:T(8,128)}', space=vmem, size = 0x1000, scoped, tag = 'scratch operand']
  %s0 = inlined_call_operand.vmem [shape: f32[4,8,64], index: 0, kind: input, shape index: {}]
  %s1 = inlined_call_operand.vmem [shape: bf16[64,192], index: 1, kind: input, shape index: {}]
  %s2 = inlined_call_operand.vmem [shape: f32[1,192], index: 2, kind: input, shape index: {}]
  %s3 = inlined_call_operand.vmem [shape: bf16[64,256], index: 3, kind: input, shape index: {}]
  %s4 = inlined_call_operand.vmem [shape: f32[1,256], index: 4, kind: input, shape index: {}]
  %s5 = inlined_call_operand.vmem [shape: bf16[256,64], index: 5, kind: input, shape index: {}]
  %s6 = inlined_call_operand.vmem [shape: f32[1,64], index: 6, kind: input, shape index: {}]
  %s7 = inlined_call_operand.hbm [shape: f32[4,8,64], index: 7, kind: output, shape index: {}]
  %s8 = sld [smem:[#allocation0]]
  $region69: #{tpu_custom_call.1} parent=0
    _
  %s10 = ssub.s32 1, %s8
  %s11 = scalar_select 0, %s10, %s8
  $region1: #{tpu_custom_call.1} parent=0
    #allocation5 [shape = 'u8[8192]{0}', space=vmem, size = 0x2000, scoped, tag = 'output window, operand 0']
    #allocation6 [shape = 's32[2]{0}', space=sflag, size = 0x8, scoped, tag = 'scoped memory for tpu_custom_call.1']
    %12 = vsyncpa [#allocation6], 0
    %s13 = scalar_lea.sflag [#allocation6], 1
    %14 = vsyncpa %s13, 0
    loop: start=0, step=1, limit=6
    $region2: #{tpu_custom_call.1} parent=1 // loop_pre_header
      _
    $region3: #{tpu_custom_call.1} parent=1 // loop_header
      %s16 = sphi 0, %s20
      %p17 = scmp.ge.s32.totalorder %s16, 6
      %s23 = sphi 0, %s35
      %s24 = sphi 0, %s31
      %s25 = sphi 0, %s23
      %s26 = sphi 0, %s24
      %s27 = sphi 0, %s25
      %s28 = sphi 0, %s26
      %s38 = sphi 0, %s40
      %s41 = sphi 0, %s38
      %s42 = sphi 0, %s41
      %s58 = sphi 0, %s42
      %s62 = sphi 0, %s62
      %s64 = sphi 0, %s62
      %s65 = sphi 0, %s64
      %s79 = sphi 0, %s65
      %s83 = sphi 0, %s83
      %s85 = sphi 0, %s83
      %s86 = sphi 0, %s85
      %s100 = sphi 0, %s86
      %s106 = sphi 0, %s108
      %s109 = sphi 0, %s106
      %s110 = sphi 0, %s109
      %s126 = sphi 0, %s110
      %s132 = sphi 0, %s134
      %s135 = sphi 0, %s132
      %s136 = sphi 0, %s135
      %s152 = sphi 0, %s136
      %s158 = sphi 0, %s160
      %s161 = sphi 0, %s158
      %s162 = sphi 0, %s161
      %s178 = sphi 0, %s162
      %s182 = sphi 0, %s182
      %s184 = sphi 0, %s182
      %s185 = sphi 0, %s184
      %s199 = sphi 0, %s185
      %s205 = sphi 0, %s207
      %s208 = sphi 0, %s205
      %s209 = sphi 0, %s208
      %s225 = sphi 0, %s209
    $region4: #{tpu_custom_call.1} parent=1 // loop_header_branch
      %19 = sbr.rel (%p17) target = $region8
    $region5: #{tpu_custom_call.1} parent=1 // loop_body
      %s21 = ssub.s32 %s16, 1
      %s22 = ssub.s32 %s16, 2
      %s29 = sadd.s32 1, %s24
      %p30 = scmp.ge.s32.totalorder %s29, 1
      %s31 = scalar_select %p30, 0, %s29
      %s32 = sadd.s32 1, %s23
      %s33 = scalar_select %p30, %s32, %s23
      %p34 = scmp.ge.s32.totalorder %s33, 4
      %s35 = scalar_select %p34, 0, %s33
      %s36 = ssub.s32 %s23, %s35
      %p37 = scmp.eq.s32.totalorder %s36, 0
      %s39 = sadd.s32 %s38, 1
      %s40 = scalar_select %p37, %s38, %s39
      %p43 = pneg %p37
      %p44 = scmp.eq.s32.totalorder %s16, 3
      %p45 = por %p43, %p44
      %p46 = scmp.ne.s32.totalorder %s38, %s41
      %p47 = scmp.eq.s32.totalorder %s16, 0
      %p48 = por %p46, %p47
      %p49 = scmp.ne.s32.totalorder %s38, %s41
      %p50 = scmp.eq.s32.totalorder %s21, 3
      %p51 = por %p49, %p50
      %p52 = scmp.ne.s32.totalorder %s41, %s42
      %p53 = scmp.eq.s32.totalorder %s21, 0
      %p54 = por %p52, %p53
      %p55 = scmp.ne.s32.totalorder %s41, %s42
      %p56 = scmp.eq.s32.totalorder %s22, 3
      %p57 = por %p55, %p56
      %p59 = scmp.ne.s32.totalorder %s42, %s58
      %p60 = scmp.eq.s32.totalorder %s22, 0
      %p61 = por %p59, %p60
      %s63 = sadd.s32 %s62, 1
      %p66 = scmp.eq.s32.totalorder %s16, 3
      %p67 = scmp.ne.s32.totalorder %s62, %s64
      %p68 = scmp.eq.s32.totalorder %s16, 0
      %p69 = por %p67, %p68
      %p70 = scmp.ne.s32.totalorder %s62, %s64
      %p71 = scmp.eq.s32.totalorder %s21, 3
      %p72 = por %p70, %p71
      %p73 = scmp.ne.s32.totalorder %s64, %s65
      %p74 = scmp.eq.s32.totalorder %s21, 0
      %p75 = por %p73, %p74
      %p76 = scmp.ne.s32.totalorder %s64, %s65
      %p77 = scmp.eq.s32.totalorder %s22, 3
      %p78 = por %p76, %p77
      %p80 = scmp.ne.s32.totalorder %s65, %s79
      %p81 = scmp.eq.s32.totalorder %s22, 0
      %p82 = por %p80, %p81
      %s84 = sadd.s32 %s83, 1
      %p87 = scmp.eq.s32.totalorder %s16, 3
      %p88 = scmp.ne.s32.totalorder %s83, %s85
      %p89 = scmp.eq.s32.totalorder %s16, 0
      %p90 = por %p88, %p89
      %p91 = scmp.ne.s32.totalorder %s83, %s85
      %p92 = scmp.eq.s32.totalorder %s21, 3
      %p93 = por %p91, %p92
      %p94 = scmp.ne.s32.totalorder %s85, %s86
      %p95 = scmp.eq.s32.totalorder %s21, 0
      %p96 = por %p94, %p95
      %p97 = scmp.ne.s32.totalorder %s85, %s86
      %p98 = scmp.eq.s32.totalorder %s22, 3
      %p99 = por %p97, %p98
      %p101 = scmp.ne.s32.totalorder %s86, %s100
      %p102 = scmp.eq.s32.totalorder %s22, 0
      %p103 = por %p101, %p102
      %s104 = ssub.s32 %s24, %s31
      %p105 = scmp.eq.s32.totalorder %s104, 0
      %s107 = sadd.s32 %s106, 1
      %s108 = scalar_select %p105, %s106, %s107
      %p111 = pneg %p105
      %p112 = scmp.eq.s32.totalorder %s16, 3
      %p113 = por %p111, %p112
      %p114 = scmp.ne.s32.totalorder %s106, %s109
      %p115 = scmp.eq.s32.totalorder %s16, 0
      %p116 = por %p114, %p115
      %p117 = scmp.ne.s32.totalorder %s106, %s109
      %p118 = scmp.eq.s32.totalorder %s21, 3
      %p119 = por %p117, %p118
      %p120 = scmp.ne.s32.totalorder %s109, %s110
      %p121 = scmp.eq.s32.totalorder %s21, 0
      %p122 = por %p120, %p121
      %p123 = scmp.ne.s32.totalorder %s109, %s110
      %p124 = scmp.eq.s32.totalorder %s22, 3
      %p125 = por %p123, %p124
      %p127 = scmp.ne.s32.totalorder %s110, %s126
      %p128 = scmp.eq.s32.totalorder %s22, 0
      %p129 = por %p127, %p128
      %s130 = ssub.s32 %s24, %s31
      %p131 = scmp.eq.s32.totalorder %s130, 0
      %s133 = sadd.s32 %s132, 1
      %s134 = scalar_select %p131, %s132, %s133
      %p137 = pneg %p131
      %p138 = scmp.eq.s32.totalorder %s16, 3
      %p139 = por %p137, %p138
      %p140 = scmp.ne.s32.totalorder %s132, %s135
      %p141 = scmp.eq.s32.totalorder %s16, 0
      %p142 = por %p140, %p141
      %p143 = scmp.ne.s32.totalorder %s132, %s135
      %p144 = scmp.eq.s32.totalorder %s21, 3
      %p145 = por %p143, %p144
      %p146 = scmp.ne.s32.totalorder %s135, %s136
      %p147 = scmp.eq.s32.totalorder %s21, 0
      %p148 = por %p146, %p147
      %p149 = scmp.ne.s32.totalorder %s135, %s136
      %p150 = scmp.eq.s32.totalorder %s22, 3
      %p151 = por %p149, %p150
      %p153 = scmp.ne.s32.totalorder %s136, %s152
      %p154 = scmp.eq.s32.totalorder %s22, 0
      %p155 = por %p153, %p154
      %s156 = ssub.s32 %s24, %s31
      %p157 = scmp.eq.s32.totalorder %s156, 0
      %s159 = sadd.s32 %s158, 1
      %s160 = scalar_select %p157, %s158, %s159
      %p163 = pneg %p157
      %p164 = scmp.eq.s32.totalorder %s16, 3
      %p165 = por %p163, %p164
      %p166 = scmp.ne.s32.totalorder %s158, %s161
      %p167 = scmp.eq.s32.totalorder %s16, 0
      %p168 = por %p166, %p167
      %p169 = scmp.ne.s32.totalorder %s158, %s161
      %p170 = scmp.eq.s32.totalorder %s21, 3
      %p171 = por %p169, %p170
      %p172 = scmp.ne.s32.totalorder %s161, %s162
      %p173 = scmp.eq.s32.totalorder %s21, 0
      %p174 = por %p172, %p173
      %p175 = scmp.ne.s32.totalorder %s161, %s162
      %p176 = scmp.eq.s32.totalorder %s22, 3
      %p177 = por %p175, %p176
      %p179 = scmp.ne.s32.totalorder %s162, %s178
      %p180 = scmp.eq.s32.totalorder %s22, 0
      %p181 = por %p179, %p180
      %s183 = sadd.s32 %s182, 1
      %p186 = scmp.eq.s32.totalorder %s16, 3
      %p187 = scmp.ne.s32.totalorder %s182, %s184
      %p188 = scmp.eq.s32.totalorder %s16, 0
      %p189 = por %p187, %p188
      %p190 = scmp.ne.s32.totalorder %s182, %s184
      %p191 = scmp.eq.s32.totalorder %s21, 3
      %p192 = por %p190, %p191
      %p193 = scmp.ne.s32.totalorder %s184, %s185
      %p194 = scmp.eq.s32.totalorder %s21, 0
      %p195 = por %p193, %p194
      %p196 = scmp.ne.s32.totalorder %s184, %s185
      %p197 = scmp.eq.s32.totalorder %s22, 3
      %p198 = por %p196, %p197
      %p200 = scmp.ne.s32.totalorder %s185, %s199
      %p201 = scmp.eq.s32.totalorder %s22, 0
      %p202 = por %p200, %p201
      %s203 = ssub.s32 %s23, %s35
      %p204 = scmp.eq.s32.totalorder %s203, 0
      %s206 = sadd.s32 %s205, 1
      %s207 = scalar_select %p204, %s205, %s206
      %p210 = pneg %p204
      %p211 = scmp.eq.s32.totalorder %s16, 3
      %p212 = por %p210, %p211
      %p213 = scmp.ne.s32.totalorder %s205, %s208
      %p214 = scmp.eq.s32.totalorder %s16, 0
      %p215 = por %p213, %p214
      %p216 = scmp.ne.s32.totalorder %s205, %s208
      %p217 = scmp.eq.s32.totalorder %s21, 3
      %p218 = por %p216, %p217
      %p219 = scmp.ne.s32.totalorder %s208, %s209
      %p220 = scmp.eq.s32.totalorder %s21, 0
      %p221 = por %p219, %p220
      %p222 = scmp.ne.s32.totalorder %s208, %s209
      %p223 = scmp.eq.s32.totalorder %s22, 3
      %p224 = por %p222, %p223
      %p226 = scmp.ne.s32.totalorder %s209, %s225
      %p227 = scmp.eq.s32.totalorder %s22, 0
      %p228 = por %p226, %p227
      %p229 = scmp.le.s32.totalorder 1, %s16
      %p230 = scmp.lt.s32.totalorder %s16, 5
      %p231 = pnand %p229, %p230
      %p232 = pneg %p231
      // Predicated region
      $region9: #{tpu_custom_call.1} parent=5 // pred_check
        _
      $region10: #{tpu_custom_call.1} parent=5 // pred_check_branch
        %234 = sbr.rel (%p231) target = $region12
      $region11: #{tpu_custom_call.1} parent=5 // pred_region
        %s235 = ssub.s32 %s16, 1
        // Predicated region
        $region13: #{tpu_custom_call.1} parent=11 // pred_check
          %p236 = pneg %p75
        $region14: #{tpu_custom_call.1} parent=11 // pred_check_branch
          %238 = sbr.rel (%p236) target = $region16
        $region15: #{tpu_custom_call.1} parent=11 // pred_region
          _
        $region16: #{tpu_custom_call.1} parent=11 // pred_fallthru
          _
        // Predicated region
        $region17: #{tpu_custom_call.1} parent=11 // pred_check
          %p239 = pneg %p96
        $region18: #{tpu_custom_call.1} parent=11 // pred_check_branch
          %241 = sbr.rel (%p239) target = $region20
        $region19: #{tpu_custom_call.1} parent=11 // pred_region
          _
        $region20: #{tpu_custom_call.1} parent=11 // pred_fallthru
          _
        // Predicated region
        $region21: #{tpu_custom_call.1} parent=11 // pred_check
          %p242 = pneg %p122
        $region22: #{tpu_custom_call.1} parent=11 // pred_check_branch
          %244 = sbr.rel (%p242) target = $region24
        $region23: #{tpu_custom_call.1} parent=11 // pred_region
          %s245 = smul.u32 2, %s26
          %p246 = scmp.lt.s32.totalorder %s245, 1
          %s247 = scalar_select %p246, %s245, 1
          %s248 = smul.addr %s247, 4
          %s249 = scalar_lea.vmem %s3, %s248
          %s250 = smul.u32 2, %s26
        $region24: #{tpu_custom_call.1} parent=11 // pred_fallthru
          _
        // Predicated region
        $region25: #{tpu_custom_call.1} parent=11 // pred_check
          %p251 = pneg %p148
        $region26: #{tpu_custom_call.1} parent=11 // pred_check_branch
          %253 = sbr.rel (%p251) target = $region28
        $region27: #{tpu_custom_call.1} parent=11 // pred_region
          %s254 = smul.u32 2, %s26
          %p255 = scmp.lt.s32.totalorder %s254, 1
          %s256 = scalar_select %p255, %s254, 1
          %s257 = scalar_lea.vmem %s4, %s256
          %s258 = smul.u32 2, %s26
        $region28: #{tpu_custom_call.1} parent=11 // pred_fallthru
          _
        // Predicated region
        $region29: #{tpu_custom_call.1} parent=11 // pred_check
          %p259 = pneg %p174
        $region30: #{tpu_custom_call.1} parent=11 // pred_check_branch
          %261 = sbr.rel (%p259) target = $region32
        $region31: #{tpu_custom_call.1} parent=11 // pred_region
          %s262 = smul.u32 32, %s26
          %p263 = scmp.lt.s32.totalorder %s262, 31
          %s264 = scalar_select %p263, %s262, 31
          %s265 = smul.addr %s264, 4
          %s266 = scalar_lea.vmem %s5, %s265
          %s267 = smul.u32 32, %s26
        $region32: #{tpu_custom_call.1} parent=11 // pred_fallthru
          _
        // Predicated region
        $region33: #{tpu_custom_call.1} parent=11 // pred_check
          %p268 = pneg %p195
        $region34: #{tpu_custom_call.1} parent=11 // pred_check_branch
          %270 = sbr.rel (%p268) target = $region36
        $region35: #{tpu_custom_call.1} parent=11 // pred_region
          _
        $region36: #{tpu_custom_call.1} parent=11 // pred_fallthru
          _
      $region12: #{tpu_custom_call.1} parent=5 // pred_fallthru
        _
      %p271 = scmp.lt.s32.totalorder %s16, 4
      // Predicated region
      $region37: #{tpu_custom_call.1} parent=5 // pred_check
        %p272 = pneg %p271
      $region38: #{tpu_custom_call.1} parent=5 // pred_check_branch
        %274 = sbr.rel (%p272) target = $region40
      $region39: #{tpu_custom_call.1} parent=5 // pred_region
        // Predicated region
        $region41: #{tpu_custom_call.1} parent=39 // pred_check
          %p275 = pneg %p48
        $region42: #{tpu_custom_call.1} parent=39 // pred_check_branch
          %277 = sbr.rel (%p275) target = $region44
        $region43: #{tpu_custom_call.1} parent=39 // pred_region
          %p278 = scmp.lt.s32.totalorder %s23, 3
          %s279 = scalar_select %p278, %s23, 3
          %s280 = smul.addr %s279, 8
          %s281 = scalar_lea.vmem %s0, %s280
        $region44: #{tpu_custom_call.1} parent=39 // pred_fallthru
          _
      $region40: #{tpu_custom_call.1} parent=5 // pred_fallthru
        _
      %p282 = scmp.le.s32.totalorder 1, %s16
      %p283 = scmp.lt.s32.totalorder %s16, 5
      %p284 = pnand %p282, %p283
      %p285 = pneg %p284
      // Predicated region
      $region45: #{tpu_custom_call.1} parent=5 // pred_check
        _
      $region46: #{tpu_custom_call.1} parent=5 // pred_check_branch
        %287 = sbr.rel (%p284) target = $region48
      $region47: #{tpu_custom_call.1} parent=5 // pred_region
        %s288 = ssub.s32 %s16, 1
        %p289 = scmp.lt.s32.totalorder %s25, 3
        %s290 = scalar_select %p289, %s25, 3
        %s291 = smul.addr %s290, 8
        %s292 = scalar_lea.vmem %s0, %s291
        %p293 = pneg %p54
        %p294 = pneg %p51
        %p295 = pneg %p75
        %p296 = pneg %p72
        %p297 = pneg %p96
        %p298 = pneg %p93
        %s299 = smul.u32 2, %s26
        %p300 = scmp.lt.s32.totalorder %s299, 1
        %s301 = scalar_select %p300, %s299, 1
        %s302 = smul.addr %s301, 4
        %s303 = scalar_lea.vmem %s3, %s302
        %p304 = pneg %p122
        %p305 = pneg %p119
        %s306 = smul.u32 2, %s26
        %p307 = scmp.lt.s32.totalorder %s306, 1
        %s308 = scalar_select %p307, %s306, 1
        %s309 = scalar_lea.vmem %s4, %s308
        %p310 = pneg %p148
        %p311 = pneg %p145
        %s312 = smul.u32 32, %s26
        %p313 = scmp.lt.s32.totalorder %s312, 31
        %s314 = scalar_select %p313, %s312, 31
        %s315 = smul.addr %s314, 4
        %s316 = scalar_lea.vmem %s5, %s315
        %p317 = pneg %p174
        %p318 = pneg %p171
        %p319 = pneg %p195
        %p320 = pneg %p192
        %p321 = pneg %p221
        %p322 = pneg %p218
        %s323 = sand.u32 %s208, 1
        %s324 = scalar_lea.sflag [#allocation6], %s323
        %s325 = sand.u32 %s208, 1
        %s326 = smul.addr %s325, 8
        %s327 = scalar_lea.vmem [#allocation5], %s326
        %p328 = scmp.lt.s32.totalorder %s25, 3
        %s329 = scalar_select %p328, %s25, 3
        %s330 = smul.addr %s329, 8
        %s331 = scalar_lea.vmem %s0, %s330
        %s332 = smul.u32 2, %s26
        %p333 = scmp.lt.s32.totalorder %s332, 1
        %s334 = scalar_select %p333, %s332, 1
        %s335 = smul.addr %s334, 4
        %s336 = scalar_lea.vmem %s3, %s335
        %s337 = smul.u32 2, %s26
        %s338 = smul.u32 2, %s26
        %p339 = scmp.lt.s32.totalorder %s338, 1
        %s340 = scalar_select %p339, %s338, 1
        %s341 = scalar_lea.vmem %s4, %s340
        %s342 = smul.u32 2, %s26
        %s343 = smul.u32 32, %s26
        %p344 = scmp.lt.s32.totalorder %s343, 31
        %s345 = scalar_select %p344, %s343, 31
        %s346 = smul.addr %s345, 4
        %s347 = scalar_lea.vmem %s5, %s346
        %s348 = smul.u32 32, %s26
        %p350 = scmp.eq.s32.totalorder %s26, 0
        // Predicated region
        $region49: #{tpu_custom_call.1} parent=47 // pred_check
          %p351 = pneg %p350
        $region50: #{tpu_custom_call.1} parent=47 // pred_check_branch
          %353 = sbr.rel (%p351) target = $region52
        $region51: #{tpu_custom_call.1} parent=47 // pred_region
          %v354 = vld [vmem:[%s331] sm:$0xff]
          %vm355 = vcmask 523264
          %v356 = vsel %vm355, %v354, 0.0
          %357 = vadd.xlane.f32.xlu0 %v356
          %v358 = vpop.xlane.xlu0 %357
          %v359 = vrcp.pop 64.0
          %v360 = vmul.f32 %v358, %v359
          %v361 = vmul.f32 %v354, %v354
          %v362 = vsel %vm355, %v361, 0.0
          %363 = vadd.xlane.f32.xlu0 %v362
          %v364 = vpop.xlane.xlu0 %363
          %v365 = vmul.f32 %v364, %v359
          %v366 = vmul.f32 %v360, %v360
          %v367 = vsub.f32 %v365, %v366
          %v368 = vmax.f32 %v367, 0.0
          %v369 = vsub.f32 %v354, %v360
          %v370 = vadd.f32 %v368, 1e-05
          %v371 = vrsqrt.pop %v370
          %v372 = vmul.f32 %v369, %v371
          %v373 = vpack.c.bf16 %v372, %v372
          %v374 = vld [vmem:[%s1] sm:$0xff]
          %v375 = vld [vmem:[%s1 + $0x8] sm:$0xff]
          %v376 = vld [vmem:[%s1 + $0x10] sm:$0xff]
          %v377 = vld [vmem:[%s1 + $0x18] sm:$0xff]
          %v378 = vld [vmem:[%s1 + $0x20] sm:$0xff]
          %v379 = vld [vmem:[%s1 + $0x28] sm:$0xff]
          %v380 = vld [vmem:[%s1 + $0x30] sm:$0xff]
          %v381 = vld [vmem:[%s1 + $0x38] sm:$0xff]
          %v382 = vld [vmem:[%s2] sm:$0x3]
          %v384 = vlaneseq
          %v385 = vshrl.u32 %v384, 7
          %v386 = vsub.s32 0, %v385
          %v387 = vrot.slane %v382, %v386
          %v388 = vlaneseq
          %v389 = vshrl.u32 %v388, 7
          %v390 = vsub.s32 1, %v389
          %v391 = vrot.slane %v382, %v390
          %v402 = vunpack.c.l.b16 %v374
          %v403 = vunpack.c.h.b16 %v374
          %v404 = vunpack.c.l.b16 %v375
          %v405 = vunpack.c.h.b16 %v375
          %v406 = vunpack.c.l.b16 %v376
          %v407 = vunpack.c.h.b16 %v376
          %v408 = vunpack.c.l.b16 %v377
          %v409 = vunpack.c.h.b16 %v377
          %v410 = vunpack.c.l.b16 %v378
          %v411 = vunpack.c.h.b16 %v378
          %v412 = vunpack.c.l.b16 %v379
          %v413 = vunpack.c.h.b16 %v379
          %v414 = vunpack.c.l.b16 %v380
          %v415 = vunpack.c.h.b16 %v380
          %v416 = vunpack.c.l.b16 %v381
          %v417 = vunpack.c.h.b16 %v381
          %v418 = vpack.c.b16 %v404, %v402
          %v419 = vpack.c.b16 %v405, %v403
          %v420 = vpack.c.b16 %v408, %v406
          %v421 = vpack.c.b16 %v409, %v407
          %v422 = vpack.c.b16 %v412, %v410
          %v423 = vpack.c.b16 %v413, %v411
          %v424 = vpack.c.b16 %v416, %v414
          %v425 = vpack.c.b16 %v417, %v415
          %v435 = vsel %vm355, %v373, 0
          %437 = vmatprep.subr.bf16.mxu0 0
          %438 = vmatpush1.bf16.msra.mxu0 0
          %439 = vmatprep.subr.bf16.mxu0 0
          %440 = vmatpush1.bf16.msra.mxu0 0
          %441 = vmatprep.subr.bf16.mxu0 0
          %442 = vmatpush1.bf16.msra.mxu0 0
          %443 = vmatprep.subr.bf16.mxu0 0
          %444 = vmatpush1.bf16.msra.mxu0 0
          %445 = vmatprep.subr.bf16.mxu0 %v425
          %446 = vmatpush1.bf16.msra.mxu0 %v424
          %447 = vmatprep.subr.bf16.mxu0 %v423
          %448 = vmatpush1.bf16.msra.mxu0 %v422
          %449 = vmatprep.subr.bf16.mxu0 %v421
          %450 = vmatpush1.bf16.msra.mxu0 %v420
          %451 = vmatprep.subr.bf16.mxu0 %v419
          %452 = vmatpush1.bf16.msra.mxu0 %v418
          %453 = vmatprep.subr.bf16.mxu0 0
          %454 = vmatpush2.bf16.msra.mxu0 0
          %455 = vmatprep.subr.bf16.mxu0 0
          %456 = vmatpush2.bf16.msra.mxu0 0
          %457 = vmatprep.subr.bf16.mxu0 0
          %458 = vmatpush2.bf16.msra.mxu0 0
          %459 = vmatprep.subr.bf16.mxu0 0
          %460 = vmatpush2.bf16.msra.mxu0 0
          %461 = vmatprep.subr.bf16.mxu0 0
          %462 = vmatpush2.bf16.msra.mxu0 0
          %463 = vmatprep.subr.bf16.mxu0 0
          %464 = vmatpush2.bf16.msra.mxu0 0
          %465 = vmatprep.subr.bf16.mxu0 0
          %466 = vmatpush2.bf16.msra.mxu0 0
          %467 = vmatprep.subr.bf16.mxu0 0
          %468 = vmatpush2.bf16.msra.mxu0 0
          %469 = vmatprep.mubr.bf16.mxu0 0
          %470 = vmatmul.mubr.bf16.gmra.mxu0 %v435
          %v471 = vpop.f32.mrf.mxu0
          %v472 = vadd.f32 %v387, %v471
          %v473 = vpop.f32.mrf.mxu0
          %v474 = vadd.f32 %v391, %v473
          %v475 = vpop.f32.mrf.mxu0
          %v476 = vpop.f32.mrf.mxu0
          %477 = vdwg.mxu0
          %v478 = vpack.c.bf16 %v472, %v472
          %480 = vrot.lane.b32.xlu0 %v478, 64
          %v481 = vpop.permute.xlu0 %480
          %vm482 = vcmask 261120
          %v484 = vsel %vm482, %v478, 0
          %v487 = vsel %vm482, %v481, 0
          %489 = vmatprep.subr.bf16.mxu0 0
          %490 = vmatpush1.bf16.xpose.msra.mxu0 0
          %491 = vmatprep.subr.bf16.mxu0 0
          %492 = vmatpush1.bf16.xpose.msra.mxu0 0
          %493 = vmatprep.subr.bf16.mxu0 0
          %494 = vmatpush1.bf16.xpose.msra.mxu0 0
          %495 = vmatprep.subr.bf16.mxu0 0
          %496 = vmatpush1.bf16.xpose.msra.mxu0 0
          %497 = vmatprep.subr.bf16.mxu0 0
          %498 = vmatpush1.bf16.xpose.msra.mxu0 0
          %499 = vmatprep.subr.bf16.mxu0 0
          %500 = vmatpush1.bf16.xpose.msra.mxu0 0
          %501 = vmatprep.subr.bf16.mxu0 0
          %502 = vmatpush1.bf16.xpose.msra.mxu0 0
          %503 = vmatprep.subr.bf16.mxu0 0
          %504 = vmatpush1.bf16.xpose.msra.mxu0 %v487
          %505 = vmatprep.subr.bf16.mxu0 0
          %506 = vmatpush2.bf16.xpose.msra.mxu0 0
          %507 = vmatprep.subr.bf16.mxu0 0
          %508 = vmatpush2.bf16.xpose.msra.mxu0 0
          %509 = vmatprep.subr.bf16.mxu0 0
          %510 = vmatpush2.bf16.xpose.msra.mxu0 0
          %511 = vmatprep.subr.bf16.mxu0 0
          %512 = vmatpush2.bf16.xpose.msra.mxu0 0
          %513 = vmatprep.subr.bf16.mxu0 0
          %514 = vmatpush2.bf16.xpose.msra.mxu0 0
          %515 = vmatprep.subr.bf16.mxu0 0
          %516 = vmatpush2.bf16.xpose.msra.mxu0 0
          %517 = vmatprep.subr.bf16.mxu0 0
          %518 = vmatpush2.bf16.xpose.msra.mxu0 0
          %519 = vmatprep.subr.bf16.mxu0 0
          %520 = vmatpush2.bf16.xpose.msra.mxu0 0
          %521 = vmatprep.mubr.bf16.mxu0 0
          %522 = vmatmul.mubr.bf16.gmra.mxu0 %v484
          %v523 = vpop.f32.mrf.mxu0
          %v524 = vadd.f32 0.0, %v523
          %v525 = vpop.f32.mrf.mxu0
          %v526 = vpop.f32.mrf.mxu0
          %v527 = vpop.f32.mrf.mxu0
          %528 = vdwg.mxu0
          %vm529 = vcmask 64512
          %v530 = vsel %vm529, %v524, -inf
          %531 = vmax.xlane.f32.xlu0 %v530
          %v532 = vpop.xlane.xlu0 %531
          %v533 = vsub.f32 %v524, %v532
          %v534 = vmul.f32 %v533, 1.442695
          %v535 = vpow.pop %v534
          %v536 = vsel %vm529, %v535, 0.0
          %537 = vadd.xlane.f32.xlu0 %v536
          %v538 = vpop.xlane.xlu0 %537
          %v539 = vrcp.pop %v538
          %v540 = vmul.f32 %v535, %v539
          %v541 = vpack.c.bf16 %v540, %v540
          %v542 = vpack.c.bf16 %v474, %v474
          %v544 = vsel %vm529, %v541, 0
          %vm546 = vcmask 1043456
          %v548 = vsel %vm546, %v542, 0
          %550 = vmatprep.subr.bf16.mxu0 0
          %551 = vmatpush1.bf16.msra.mxu0 0
          %552 = vmatprep.subr.bf16.mxu0 0
          %553 = vmatpush1.bf16.msra.mxu0 0
          %554 = vmatprep.subr.bf16.mxu0 0
          %555 = vmatpush1.bf16.msra.mxu0 0
          %556 = vmatprep.subr.bf16.mxu0 0
          %557 = vmatpush1.bf16.msra.mxu0 0
          %558 = vmatprep.subr.bf16.mxu0 0
          %559 = vmatpush1.bf16.msra.mxu0 0
          %560 = vmatprep.subr.bf16.mxu0 0
          %561 = vmatpush1.bf16.msra.mxu0 0
          %562 = vmatprep.subr.bf16.mxu0 0
          %563 = vmatpush1.bf16.msra.mxu0 0
          %564 = vmatprep.subr.bf16.mxu0 0
          %565 = vmatpush1.bf16.msra.mxu0 %v548
          %566 = vmatprep.subr.bf16.mxu0 0
          %567 = vmatpush2.bf16.msra.mxu0 0
          %568 = vmatprep.subr.bf16.mxu0 0
          %569 = vmatpush2.bf16.msra.mxu0 0
          %570 = vmatprep.subr.bf16.mxu0 0
          %571 = vmatpush2.bf16.msra.mxu0 0
          %572 = vmatprep.subr.bf16.mxu0 0
          %573 = vmatpush2.bf16.msra.mxu0 0
          %574 = vmatprep.subr.bf16.mxu0 0
          %575 = vmatpush2.bf16.msra.mxu0 0
          %576 = vmatprep.subr.bf16.mxu0 0
          %577 = vmatpush2.bf16.msra.mxu0 0
          %578 = vmatprep.subr.bf16.mxu0 0
          %579 = vmatpush2.bf16.msra.mxu0 0
          %580 = vmatprep.subr.bf16.mxu0 0
          %581 = vmatpush2.bf16.msra.mxu0 0
          %582 = vmatprep.mubr.bf16.mxu0 0
          %583 = vmatmul.mubr.bf16.gmra.mxu0 %v544
          %v584 = vpop.f32.mrf.mxu0
          %v585 = vadd.f32 0.0, %v584
          %v586 = vpop.f32.mrf.mxu0
          %v587 = vpop.f32.mrf.mxu0
          %v588 = vpop.f32.mrf.mxu0
          %589 = vdwg.mxu0
          %590 = vrot.lane.b32.xlu0 %v478, 96
          %v591 = vpop.permute.xlu0 %590
          %592 = vrot.lane.b32.xlu0 %v478, 32
          %v593 = vpop.permute.xlu0 %592
          %v595 = vsel %vm482, %v591, 0
          %v598 = vsel %vm482, %v593, 0
          %600 = vmatprep.subr.bf16.mxu0 0
          %601 = vmatpush1.bf16.xpose.msra.mxu0 0
          %602 = vmatprep.subr.bf16.mxu0 0
          %603 = vmatpush1.bf16.xpose.msra.mxu0 0
          %604 = vmatprep.subr.bf16.mxu0 0
          %605 = vmatpush1.bf16.xpose.msra.mxu0 0
          %606 = vmatprep.subr.bf16.mxu0 0
          %607 = vmatpush1.bf16.xpose.msra.mxu0 0
          %608 = vmatprep.subr.bf16.mxu0 0
          %609 = vmatpush1.bf16.xpose.msra.mxu0 0
          %610 = vmatprep.subr.bf16.mxu0 0
          %611 = vmatpush1.bf16.xpose.msra.mxu0 0
          %612 = vmatprep.subr.bf16.mxu0 0
          %613 = vmatpush1.bf16.xpose.msra.mxu0 0
          %614 = vmatprep.subr.bf16.mxu0 0
          %615 = vmatpush1.bf16.xpose.msra.mxu0 %v598
          %616 = vmatprep.subr.bf16.mxu0 0
          %617 = vmatpush2.bf16.xpose.msra.mxu0 0
          %618 = vmatprep.subr.bf16.mxu0 0
          %619 = vmatpush2.bf16.xpose.msra.mxu0 0
          %620 = vmatprep.subr.bf16.mxu0 0
          %621 = vmatpush2.bf16.xpose.msra.mxu0 0
          %622 = vmatprep.subr.bf16.mxu0 0
          %623 = vmatpush2.bf16.xpose.msra.mxu0 0
          %624 = vmatprep.subr.bf16.mxu0 0
          %625 = vmatpush2.bf16.xpose.msra.mxu0 0
          %626 = vmatprep.subr.bf16.mxu0 0
          %627 = vmatpush2.bf16.xpose.msra.mxu0 0
          %628 = vmatprep.subr.bf16.mxu0 0
          %629 = vmatpush2.bf16.xpose.msra.mxu0 0
          %630 = vmatprep.subr.bf16.mxu0 0
          %631 = vmatpush2.bf16.xpose.msra.mxu0 0
          %632 = vmatprep.mubr.bf16.mxu0 0
          %633 = vmatmul.mubr.bf16.gmra.mxu0 %v595
          %v634 = vpop.f32.mrf.mxu0
          %v635 = vadd.f32 0.0, %v634
          %v636 = vpop.f32.mrf.mxu0
          %v637 = vpop.f32.mrf.mxu0
          %v638 = vpop.f32.mrf.mxu0
          %639 = vdwg.mxu0
          %v640 = vsel %vm529, %v635, -inf
          %641 = vmax.xlane.f32.xlu0 %v640
          %v642 = vpop.xlane.xlu0 %641
          %v643 = vsub.f32 %v635, %v642
          %v644 = vmul.f32 %v643, 1.442695
          %v645 = vpow.pop %v644
          %v646 = vsel %vm529, %v645, 0.0
          %647 = vadd.xlane.f32.xlu0 %v646
          %v648 = vpop.xlane.xlu0 %647
          %v649 = vrcp.pop %v648
          %v650 = vmul.f32 %v645, %v649
          %v651 = vpack.c.bf16 %v650, %v650
          %653 = vrot.lane.b32.xlu0 %v542, 96
          %v654 = vpop.permute.xlu0 %653
          %v656 = vsel %vm529, %v651, 0
          %v659 = vsel %vm546, %v654, 0
          %661 = vmatprep.subr.bf16.mxu0 0
          %662 = vmatpush1.bf16.msra.mxu0 0
          %663 = vmatprep.subr.bf16.mxu0 0
          %664 = vmatpush1.bf16.msra.mxu0 0
          %665 = vmatprep.subr.bf16.mxu0 0
          %666 = vmatpush1.bf16.msra.mxu0 0
          %667 = vmatprep.subr.bf16.mxu0 0
          %668 = vmatpush1.bf16.msra.mxu0 0
          %669 = vmatprep.subr.bf16.mxu0 0
          %670 = vmatpush1.bf16.msra.mxu0 0
          %671 = vmatprep.subr.bf16.mxu0 0
          %672 = vmatpush1.bf16.msra.mxu0 0
          %673 = vmatprep.subr.bf16.mxu0 0
          %674 = vmatpush1.bf16.msra.mxu0 0
          %675 = vmatprep.subr.bf16.mxu0 0
          %676 = vmatpush1.bf16.msra.mxu0 %v659
          %677 = vmatprep.subr.bf16.mxu0 0
          %678 = vmatpush2.bf16.msra.mxu0 0
          %679 = vmatprep.subr.bf16.mxu0 0
          %680 = vmatpush2.bf16.msra.mxu0 0
          %681 = vmatprep.subr.bf16.mxu0 0
          %682 = vmatpush2.bf16.msra.mxu0 0
          %683 = vmatprep.subr.bf16.mxu0 0
          %684 = vmatpush2.bf16.msra.mxu0 0
          %685 = vmatprep.subr.bf16.mxu0 0
          %686 = vmatpush2.bf16.msra.mxu0 0
          %687 = vmatprep.subr.bf16.mxu0 0
          %688 = vmatpush2.bf16.msra.mxu0 0
          %689 = vmatprep.subr.bf16.mxu0 0
          %690 = vmatpush2.bf16.msra.mxu0 0
          %691 = vmatprep.subr.bf16.mxu0 0
          %692 = vmatpush2.bf16.msra.mxu0 0
          %693 = vmatprep.mubr.bf16.mxu0 0
          %694 = vmatmul.mubr.bf16.gmra.mxu0 %v656
          %v695 = vpop.f32.mrf.mxu0
          %v696 = vadd.f32 0.0, %v695
          %v697 = vpop.f32.mrf.mxu0
          %v698 = vpop.f32.mrf.mxu0
          %v699 = vpop.f32.mrf.mxu0
          %700 = vdwg.mxu0
          %702 = vrot.lane.b32.xlu0 %v696, 32
          %v703 = vpop.permute.xlu0 %702
          %v705 = vsel %vm482, %v585, %v703
          %v706 = vadd.f32 %v354, %v705
          %707 = vst.msk [vmem:[#allocation2] sm:$0xff] %vm355, %v706
          %v708 = vsel %vm355, %v706, 0.0
          %709 = vadd.xlane.f32.xlu0 %v708
          %v710 = vpop.xlane.xlu0 %709
          %v711 = vmul.f32 %v710, %v359
          %v712 = vmul.f32 %v706, %v706
          %v713 = vsel %vm355, %v712, 0.0
          %714 = vadd.xlane.f32.xlu0 %v713
          %v715 = vpop.xlane.xlu0 %714
          %v716 = vmul.f32 %v715, %v359
          %v717 = vmul.f32 %v711, %v711
          %v718 = vsub.f32 %v716, %v717
          %v719 = vmax.f32 %v718, 0.0
          %v720 = vsub.f32 %v706, %v711
          %v721 = vadd.f32 %v719, 1e-05
          %v722 = vrsqrt.pop %v721
          %v723 = vmul.f32 %v720, %v722
          %v724 = vpack.c.bf16 %v723, %v723
          %vm725 = vcmask 519168
          %726 = vst.msk [vmem:[#allocation3] sm:$0xf] %vm725, %v724
          %727 = vst.msk [vmem:[#allocation4] sm:$0xff] %vm355, 0.0
        $region52: #{tpu_custom_call.1} parent=47 // pred_fallthru
          _
        %v728 = vld [vmem:[#allocation3] sm:$0xf]
        %v729 = vld [vmem:[%s336] sm:$0xff]
        %v730 = vld [vmem:[%s336 + $0x8] sm:$0xff]
        %v731 = vld [vmem:[%s336 + $0x10] sm:$0xff]
        %v732 = vld [vmem:[%s336 + $0x18] sm:$0xff]
        %v733 = vld [vmem:[%s336 + $0x20] sm:$0xff]
        %v734 = vld [vmem:[%s336 + $0x28] sm:$0xff]
        %v735 = vld [vmem:[%s336 + $0x30] sm:$0xff]
        %v736 = vld [vmem:[%s336 + $0x38] sm:$0xff]
        %v737 = vld [vmem:[%s341] sm:$0x3]
        %v739 = vlaneseq
        %v740 = vshrl.u32 %v739, 7
        %v741 = vsub.s32 0, %v740
        %v742 = vrot.slane %v737, %v741
        %v743 = vlaneseq
        %v744 = vshrl.u32 %v743, 7
        %v745 = vsub.s32 1, %v744
        %v746 = vrot.slane %v737, %v745
        %v757 = vunpack.c.l.b16 %v729
        %v758 = vunpack.c.h.b16 %v729
        %v759 = vunpack.c.l.b16 %v730
        %v760 = vunpack.c.h.b16 %v730
        %v761 = vunpack.c.l.b16 %v731
        %v762 = vunpack.c.h.b16 %v731
        %v763 = vunpack.c.l.b16 %v732
        %v764 = vunpack.c.h.b16 %v732
        %v765 = vunpack.c.l.b16 %v733
        %v766 = vunpack.c.h.b16 %v733
        %v767 = vunpack.c.l.b16 %v734
        %v768 = vunpack.c.h.b16 %v734
        %v769 = vunpack.c.l.b16 %v735
        %v770 = vunpack.c.h.b16 %v735
        %v771 = vunpack.c.l.b16 %v736
        %v772 = vunpack.c.h.b16 %v736
        %v773 = vpack.c.b16 %v759, %v757
        %v774 = vpack.c.b16 %v760, %v758
        %v775 = vpack.c.b16 %v763, %v761
        %v776 = vpack.c.b16 %v764, %v762
        %v777 = vpack.c.b16 %v767, %v765
        %v778 = vpack.c.b16 %v768, %v766
        %v779 = vpack.c.b16 %v771, %v769
        %v780 = vpack.c.b16 %v772, %v770
        %vm789 = vcmask 523264
        %v791 = vsel %vm789, %v728, 0
        %793 = vmatprep.subr.bf16.mxu0 0
        %794 = vmatpush1.bf16.msra.mxu0 0
        %795 = vmatprep.subr.bf16.mxu0 0
        %796 = vmatpush1.bf16.msra.mxu0 0
        %797 = vmatprep.subr.bf16.mxu0 0
        %798 = vmatpush1.bf16.msra.mxu0 0
        %799 = vmatprep.subr.bf16.mxu0 0
        %800 = vmatpush1.bf16.msra.mxu0 0
        %801 = vmatprep.subr.bf16.mxu0 %v780
        %802 = vmatpush1.bf16.msra.mxu0 %v779
        %803 = vmatprep.subr.bf16.mxu0 %v778
        %804 = vmatpush1.bf16.msra.mxu0 %v777
        %805 = vmatprep.subr.bf16.mxu0 %v776
        %806 = vmatpush1.bf16.msra.mxu0 %v775
        %807 = vmatprep.subr.bf16.mxu0 %v774
        %808 = vmatpush1.bf16.msra.mxu0 %v773
        %809 = vmatprep.subr.bf16.mxu0 0
        %810 = vmatpush2.bf16.msra.mxu0 0
        %811 = vmatprep.subr.bf16.mxu0 0
        %812 = vmatpush2.bf16.msra.mxu0 0
        %813 = vmatprep.subr.bf16.mxu0 0
        %814 = vmatpush2.bf16.msra.mxu0 0
        %815 = vmatprep.subr.bf16.mxu0 0
        %816 = vmatpush2.bf16.msra.mxu0 0
        %817 = vmatprep.subr.bf16.mxu0 0
        %818 = vmatpush2.bf16.msra.mxu0 0
        %819 = vmatprep.subr.bf16.mxu0 0
        %820 = vmatpush2.bf16.msra.mxu0 0
        %821 = vmatprep.subr.bf16.mxu0 0
        %822 = vmatpush2.bf16.msra.mxu0 0
        %823 = vmatprep.subr.bf16.mxu0 0
        %824 = vmatpush2.bf16.msra.mxu0 0
        %825 = vmatprep.mubr.bf16.mxu0 0
        %826 = vmatmul.mubr.bf16.gmra.mxu0 %v791
        %v827 = vpop.f32.mrf.mxu0
        %v828 = vadd.f32 %v742, %v827
        %v829 = vpop.f32.mrf.mxu0
        %v830 = vadd.f32 %v746, %v829
        %v831 = vpop.f32.mrf.mxu0
        %v832 = vpop.f32.mrf.mxu0
        %833 = vdwg.mxu0
        %v834 = vmul.f32 %v828, 0.5
        %v835 = vmul.f32 %v830, 0.5
        %v836 = vmul.f32 %v828, 0.70710677
        %v837 = vmul.f32 %v830, 0.70710677
        %v838 = verf.f32.pop %v836
        %v839 = verf.f32.pop %v837
        %v840 = vadd.f32 %v838, 1.0
        %v841 = vadd.f32 %v839, 1.0
        %v842 = vmul.f32 %v834, %v840
        %v843 = vmul.f32 %v835, %v841
        %v844 = vld [vmem:[#allocation4] sm:$0xff]
        %v845 = vpack.c.bf16 %v842, %v842
        %v846 = vpack.c.bf16 %v843, %v843
        %v847 = vld [vmem:[%s347] sm:$0xf]
        %v848 = vld [vmem:[%s347 + $0x4] sm:$0xf]
        %v849 = vld [vmem:[%s347 + $0x8] sm:$0xf]
        %v850 = vld [vmem:[%s347 + $0xc] sm:$0xf]
        %v851 = vld [vmem:[%s347 + $0x10] sm:$0xf]
        %v852 = vld [vmem:[%s347 + $0x14] sm:$0xf]
        %v853 = vld [vmem:[%s347 + $0x18] sm:$0xf]
        %v854 = vld [vmem:[%s347 + $0x1c] sm:$0xf]
        %v855 = vld [vmem:[%s347 + $0x20] sm:$0xf]
        %v856 = vld [vmem:[%s347 + $0x24] sm:$0xf]
        %v857 = vld [vmem:[%s347 + $0x28] sm:$0xf]
        %v858 = vld [vmem:[%s347 + $0x2c] sm:$0xf]
        %v859 = vld [vmem:[%s347 + $0x30] sm:$0xf]
        %v860 = vld [vmem:[%s347 + $0x34] sm:$0xf]
        %v861 = vld [vmem:[%s347 + $0x38] sm:$0xf]
        %v862 = vld [vmem:[%s347 + $0x3c] sm:$0xf]
        %v863 = vld [vmem:[%s347 + $0x40] sm:$0xf]
        %v864 = vld [vmem:[%s347 + $0x44] sm:$0xf]
        %v865 = vld [vmem:[%s347 + $0x48] sm:$0xf]
        %v866 = vld [vmem:[%s347 + $0x4c] sm:$0xf]
        %v867 = vld [vmem:[%s347 + $0x50] sm:$0xf]
        %v868 = vld [vmem:[%s347 + $0x54] sm:$0xf]
        %v869 = vld [vmem:[%s347 + $0x58] sm:$0xf]
        %v870 = vld [vmem:[%s347 + $0x5c] sm:$0xf]
        %v871 = vld [vmem:[%s347 + $0x60] sm:$0xf]
        %v872 = vld [vmem:[%s347 + $0x64] sm:$0xf]
        %v873 = vld [vmem:[%s347 + $0x68] sm:$0xf]
        %v874 = vld [vmem:[%s347 + $0x6c] sm:$0xf]
        %v875 = vld [vmem:[%s347 + $0x70] sm:$0xf]
        %v876 = vld [vmem:[%s347 + $0x74] sm:$0xf]
        %v877 = vld [vmem:[%s347 + $0x78] sm:$0xf]
        %v878 = vld [vmem:[%s347 + $0x7c] sm:$0xf]
        %v911 = vunpack.c.l.b16 %v847
        %v912 = vunpack.c.l.b16 %v848
        %v913 = vunpack.c.l.b16 %v849
        %v914 = vunpack.c.l.b16 %v850
        %v915 = vunpack.c.l.b16 %v851
        %v916 = vunpack.c.l.b16 %v852
        %v917 = vunpack.c.l.b16 %v853
        %v918 = vunpack.c.l.b16 %v854
        %v919 = vunpack.c.l.b16 %v855
        %v920 = vunpack.c.l.b16 %v856
        %v921 = vunpack.c.l.b16 %v857
        %v922 = vunpack.c.l.b16 %v858
        %v923 = vunpack.c.l.b16 %v859
        %v924 = vunpack.c.l.b16 %v860
        %v925 = vunpack.c.l.b16 %v861
        %v926 = vunpack.c.l.b16 %v862
        %v927 = vunpack.c.l.b16 %v863
        %v928 = vunpack.c.l.b16 %v864
        %v929 = vunpack.c.l.b16 %v865
        %v930 = vunpack.c.l.b16 %v866
        %v931 = vunpack.c.l.b16 %v867
        %v932 = vunpack.c.l.b16 %v868
        %v933 = vunpack.c.l.b16 %v869
        %v934 = vunpack.c.l.b16 %v870
        %v935 = vunpack.c.l.b16 %v871
        %v936 = vunpack.c.l.b16 %v872
        %v937 = vunpack.c.l.b16 %v873
        %v938 = vunpack.c.l.b16 %v874
        %v939 = vunpack.c.l.b16 %v875
        %v940 = vunpack.c.l.b16 %v876
        %v941 = vunpack.c.l.b16 %v877
        %v942 = vunpack.c.l.b16 %v878
        %v943 = vpack.c.b16 %v912, %v911
        %v944 = vpack.c.b16 %v914, %v913
        %v945 = vpack.c.b16 %v916, %v915
        %v946 = vpack.c.b16 %v918, %v917
        %v947 = vpack.c.b16 %v920, %v919
        %v948 = vpack.c.b16 %v922, %v921
        %v949 = vpack.c.b16 %v924, %v923
        %v950 = vpack.c.b16 %v926, %v925
        %v951 = vpack.c.b16 %v928, %v927
        %v952 = vpack.c.b16 %v930, %v929
        %v953 = vpack.c.b16 %v932, %v931
        %v954 = vpack.c.b16 %v934, %v933
        %v955 = vpack.c.b16 %v936, %v935
        %v956 = vpack.c.b16 %v938, %v937
        %v957 = vpack.c.b16 %v940, %v939
        %v958 = vpack.c.b16 %v942, %v941
        %975 = vmatprep.subr.bf16.mxu0 0
        %976 = vmatpush1.bf16.msra.mxu0 %v950
        %977 = vmatprep.subr.bf16.mxu0 0
        %978 = vmatpush1.bf16.msra.mxu0 %v949
        %979 = vmatprep.subr.bf16.mxu0 0
        %980 = vmatpush1.bf16.msra.mxu0 %v948
        %981 = vmatprep.subr.bf16.mxu0 0
        %982 = vmatpush1.bf16.msra.mxu0 %v947
        %983 = vmatprep.subr.bf16.mxu0 0
        %984 = vmatpush1.bf16.msra.mxu0 %v946
        %985 = vmatprep.subr.bf16.mxu0 0
        %986 = vmatpush1.bf16.msra.mxu0 %v945
        %987 = vmatprep.subr.bf16.mxu0 0
        %988 = vmatpush1.bf16.msra.mxu0 %v944
        %989 = vmatprep.subr.bf16.mxu0 0
        %990 = vmatpush1.bf16.msra.mxu0 %v943
        %991 = vmatprep.subr.bf16.mxu0 0
        %992 = vmatpush2.bf16.msra.mxu0 %v958
        %993 = vmatprep.subr.bf16.mxu0 0
        %994 = vmatpush2.bf16.msra.mxu0 %v957
        %995 = vmatprep.subr.bf16.mxu0 0
        %996 = vmatpush2.bf16.msra.mxu0 %v956
        %997 = vmatprep.subr.bf16.mxu0 0
        %998 = vmatpush2.bf16.msra.mxu0 %v955
        %999 = vmatprep.subr.bf16.mxu0 0
        %1000 = vmatpush2.bf16.msra.mxu0 %v954
        %1001 = vmatprep.subr.bf16.mxu0 0
        %1002 = vmatpush2.bf16.msra.mxu0 %v953
        %1003 = vmatprep.subr.bf16.mxu0 0
        %1004 = vmatpush2.bf16.msra.mxu0 %v952
        %1005 = vmatprep.subr.bf16.mxu0 0
        %1006 = vmatpush2.bf16.msra.mxu0 %v951
        %1007 = vmatprep.mubr.bf16.mxu0 %v846
        %1008 = vmatmul.mubr.bf16.gmra.mxu0 %v845
        %v1009 = vpop.f32.mrf.mxu0
        %v1010 = vadd.f32 0.0, %v1009
        %v1011 = vpop.f32.mrf.mxu0
        %v1012 = vpop.f32.mrf.mxu0
        %v1013 = vpop.f32.mrf.mxu0
        %1014 = vdwg.mxu0
        %v1015 = vadd.f32 %v844, %v1010
        %1016 = vst.msk [vmem:[#allocation4] sm:$0xff] %vm789, %v1015
        // Predicated region
        $region53: #{tpu_custom_call.1} parent=47 // pred_check
          %p1017 = pneg %p350
        $region54: #{tpu_custom_call.1} parent=47 // pred_check_branch
          %1019 = sbr.rel (%p1017) target = $region56
        $region55: #{tpu_custom_call.1} parent=47 // pred_region
          %v1020 = vld [vmem:[#allocation2] sm:$0xff]
          %v1021 = vld [vmem:[#allocation4] sm:$0xff]
          %v1022 = vadd.f32 %v1020, %v1021
          %v1023 = vld [vmem:[%s6] sm:$0x1]
          %v1025 = vlaneseq
          %v1026 = vshrl.u32 %v1025, 7
          %v1027 = vsub.s32 0, %v1026
          %v1028 = vrot.slane %v1023, %v1027
          %v1030 = vadd.f32 %v1022, %v1028
          %1031 = vst.msk [vmem:[%s327] sm:$0xff] %vm789, %v1030
        $region56: #{tpu_custom_call.1} parent=47 // pred_fallthru
          _
        %s1032 = sand.u32 %s208, 1
        %s1033 = scalar_lea.sflag [#allocation6], %s1032
        %s1034 = sand.u32 %s208, 1
        %s1035 = smul.addr %s1034, 8
        %s1036 = scalar_lea.vmem [#allocation5], %s1035
        // Predicated region
        $region57: #{tpu_custom_call.1} parent=47 // pred_check
          %p1037 = pneg %p218
        $region58: #{tpu_custom_call.1} parent=47 // pred_check_branch
          %1039 = sbr.rel (%p1037) target = $region60
        $region59: #{tpu_custom_call.1} parent=47 // pred_region
          %s1041 = ssub.s32 128, 128
          %1042 = vsyncadd %s1033, %s1041
          %s1043 = smul.addr %s25, 128
          %s1044 = scalar_lea.hbm %s7, %s1043
          %s1046 = sshll.u32 %s1036, 4
          %s1047 = int_to_ptr.vmem [resolvable:$true] %s1046
          %1049 = dma.vmem_to_hbm [thread:$0]  %s1047, 128, %s1044, %s1033
        $region60: #{tpu_custom_call.1} parent=47 // pred_fallthru
          _
      $region48: #{tpu_custom_call.1} parent=5 // pred_fallthru
        _
      %p1050 = scmp.le.s32.totalorder 2, %s16
      // Predicated region
      $region61: #{tpu_custom_call.1} parent=5 // pred_check
        %p1051 = pneg %p1050
      $region62: #{tpu_custom_call.1} parent=5 // pred_check_branch
        %1053 = sbr.rel (%p1051) target = $region64
      $region63: #{tpu_custom_call.1} parent=5 // pred_region
        %s1054 = ssub.s32 %s16, 2
        // Predicated region
        $region65: #{tpu_custom_call.1} parent=63 // pred_check
          %p1055 = pneg %p224
        $region66: #{tpu_custom_call.1} parent=63 // pred_check_branch
          %1057 = sbr.rel (%p1055) target = $region68
        $region67: #{tpu_custom_call.1} parent=63 // pred_region
          %s1058 = sand.u32 %s209, 1
          %s1059 = scalar_lea.sflag [#allocation6], %s1058
          %s1060 = sand.u32 %s209, 1
          %s1061 = smul.addr %s1060, 8
          %s1062 = scalar_lea.vmem [#allocation5], %s1061
          %1063 = dma.done %s1059, 128
        $region68: #{tpu_custom_call.1} parent=63 // pred_fallthru
          _
      $region64: #{tpu_custom_call.1} parent=5 // pred_fallthru
        _
    $region6: #{tpu_custom_call.1} parent=1 // loop_footer
      %s20 = sadd.s32 1, %s16
    $region7: #{tpu_custom_call.1} parent=1 // loop_footer_branch
      %15 = sbr.rel target = $region3
    $region8: #{tpu_custom_call.1} parent=1 // loop_exit
      _
    %1064 = vsyncpa [#allocation6], 1
    %s1065 = scalar_lea.sflag [#allocation6], 1
    %1066 = vsyncpa %s1065, 1

</llo_original>
